<compile_context>
chip_gen: v5e
topology: v5e:2x2
jax: 0.10.0
libtpu: 0.0.40
codegen_flags: <defaults>
</compile_context>

<pallas_src>
import jax
import jax.numpy as jnp
from jax.experimental import pallas as pl
from jax.experimental.pallas import tpu as pltpu


def _round_up(n, m):
    return ((n + m - 1) // m) * m


def mlp_kernel(x_ref, w1_ref, b1_ref, w2_ref, b2_ref, o_ref):
    # x_ref: (TB, K_pad)   w1_ref: (K_pad, H)   b1_ref: (1, H)
    # w2_ref: (H, N_pad)   b2_ref: (1, N_pad)   o_ref: (TB, N_pad)
    x = x_ref[...]
    h = jnp.dot(x, w1_ref[...], preferred_element_type=jnp.float32) + b1_ref[...]
    h = jnp.maximum(h, 0.0)                                   # nn.ReLU()
    y = jnp.dot(h, w2_ref[...], preferred_element_type=jnp.float32) + b2_ref[...]
    o_ref[...] = y.astype(o_ref.dtype)


def my_sequential_list(x, w1, b1, w2, b2, *, block_b=256):
    """x: (B, 20) f32 -> (B, 10) f32.

    Grids over batch with weights held VMEM-resident; feature dims are padded once
    in the wrapper (K: 20->32, N: 10->128) for aligned loads and lane-dense stores.
    """
    B, K = x.shape
    K_w1, H = w1.shape
    H_w2, N = w2.shape
    assert K == K_w1 and H == H_w2

    # --- one-time layout prep (zero padding is mathematically a no-op) ---------
    K_pad = _round_up(K, 32)                 # 20 -> 32  (8-aligned sublanes for W1)
    N_pad = _round_up(N, 128)                # 10 -> 128 (full 128-lane output tile)

    # Batch tile: cap at block_b; don't over-pad tiny batches (only to sublane mult).
    TB = block_b if B >= block_b else _round_up(B, 8)
    B_pad = _round_up(B, TB)

    x_p = jnp.zeros((B_pad, K_pad), jnp.float32).at[:B, :K].set(x)
    w1_p = jnp.zeros((K_pad, H), jnp.float32).at[:K, :].set(w1)
    b1_p = b1.reshape(1, H).astype(jnp.float32)
    w2_p = jnp.zeros((H, N_pad), jnp.float32).at[:, :N].set(w2)
    b2_p = jnp.zeros((1, N_pad), jnp.float32).at[:, :N].set(b2.reshape(1, N))

    grid = (B_pad // TB,)

    flops = 2 * B_pad * (K_pad * H + H * N_pad)
    bytes_accessed = (x_p.size + w1_p.size + b1_p.size + w2_p.size + b2_p.size
                      + B_pad * N_pad) * 4

    out_p = pl.pallas_call(
        mlp_kernel,
        out_shape=jax.ShapeDtypeStruct((B_pad, N_pad), jnp.float32),
        grid=grid,
        in_specs=[
            pl.BlockSpec((TB, K_pad), lambda i: (i, 0)),   # x: streamed per batch tile
            pl.BlockSpec((K_pad, H), lambda i: (0, 0)),    # W1: VMEM-resident
            pl.BlockSpec((1, H), lambda i: (0, 0)),        # b1: VMEM-resident
            pl.BlockSpec((H, N_pad), lambda i: (0, 0)),    # W2: VMEM-resident
            pl.BlockSpec((1, N_pad), lambda i: (0, 0)),    # b2: VMEM-resident
        ],
        out_specs=pl.BlockSpec((TB, N_pad), lambda i: (i, 0)),
        compiler_params=pltpu.CompilerParams(
            dimension_semantics=("parallel",),             # megacore sharding on v7x
        ),
        cost_estimate=pl.CostEstimate(
            flops=flops, transcendentals=0, bytes_accessed=bytes_accessed),
    )(x_p, w1_p, b1_p, w2_p, b2_p)

    return out_p[:B, :N]


def init_params(key, in_f=20, hidden=256, out_f=10):
    # Deterministic synthetic init. PyTorch stores Linear weights as (out, in);
    # here they're kept pre-transposed as (in, out) so the kernel does x @ W.
    k1, k2, k3, k4 = jax.random.split(key, 4)
    w1 = jax.random.normal(k1, (in_f, hidden), jnp.float32) * (1.0 / jnp.sqrt(in_f))
    b1 = jax.random.normal(k2, (1, hidden), jnp.float32) * 0.01
    w2 = jax.random.normal(k3, (hidden, out_f), jnp.float32) * (1.0 / jnp.sqrt(hidden))
    b2 = jax.random.normal(k4, (1, out_f), jnp.float32) * 0.01
    return w1, b1, w2, b2


def _reference(x, w1, b1, w2, b2):
    return jnp.maximum(x @ w1 + b1, 0.0) @ w2 + b2


if __name__ == "__main__":
    key = jax.random.PRNGKey(0)
    kx, kp, kb = jax.random.split(key, 3)
    w1, b1, w2, b2 = init_params(kp)

    fwd = jax.jit(my_sequential_list)   # fuse pad/slice around the pallas_call

    # Small shape from the spec: torch.randn(2, 20).
    x_small = jax.random.normal(kx, (2, 20), jnp.float32)
    out_small = jax.block_until_ready(fwd(x_small, w1, b1, w2, b2))
    ref_small = _reference(x_small, w1, b1, w2, b2)
    assert out_small.shape == (2, 10)
    assert jnp.allclose(out_small, ref_small, atol=1e-5, rtol=1e-5)

    # Larger batch exercises the batch grid / resident-weight pipelining path.
    x_big = jax.random.normal(kb, (1024, 20), jnp.float32)
    out_big = jax.block_until_ready(fwd(x_big, w1, b1, w2, b2))
    ref_big = _reference(x_big, w1, b1, w2, b2)
    assert out_big.shape == (1024, 10)
    assert jnp.allclose(out_big, ref_big, atol=1e-4, rtol=1e-4)

    print("KERNEL_OK")
</pallas_src>

<mosaic_0001>
module attributes {stable_mosaic.version = 11 : i64} {
  func.func @mlp_kernel(%arg0: i32, %arg1: memref<8x32xf32, #tpu.memory_space<vmem>>, %arg2: memref<32x256xf32, #tpu.memory_space<vmem>>, %arg3: memref<1x256xf32, #tpu.memory_space<vmem>>, %arg4: memref<256x128xf32, #tpu.memory_space<vmem>>, %arg5: memref<1x128xf32, #tpu.memory_space<vmem>>, %arg6: memref<8x128xf32, #tpu.memory_space<vmem>>) attributes {dimension_semantics = [#tpu.dimension_semantics<parallel>], iteration_bounds = array<i64: 1>, scalar_prefetch = 0 : i64, scratch_operands = 0 : i64, tpu.core_type = #tpu.core_type<tc>, window_params = [{transform_indices = @transform_0, window_bounds = array<i64: 8, 32>}, {pipeline_mode = #tpu.pipeline_mode<synchronous>, transform_indices = @transform_1, window_bounds = array<i64: 32, 256>}, {pipeline_mode = #tpu.pipeline_mode<synchronous>, transform_indices = @transform_2, window_bounds = array<i64: 1, 256>}, {pipeline_mode = #tpu.pipeline_mode<synchronous>, transform_indices = @transform_3, window_bounds = array<i64: 256, 128>}, {pipeline_mode = #tpu.pipeline_mode<synchronous>, transform_indices = @transform_4, window_bounds = array<i64: 1, 128>}, {transform_indices = @transform_5, window_bounds = array<i64: 8, 128>}]} {
    %c0 = arith.constant 0 : index
    %c0_0 = arith.constant 0 : index
    %0 = vector.load %arg1[%c0, %c0_0] : memref<8x32xf32, #tpu.memory_space<vmem>>, vector<8x32xf32>
    %c0_1 = arith.constant 0 : index
    %c0_2 = arith.constant 0 : index
    %1 = vector.load %arg2[%c0_1, %c0_2] : memref<32x256xf32, #tpu.memory_space<vmem>>, vector<32x256xf32>
    %cst = arith.constant dense<0.000000e+00> : vector<8x256xf32>
    %2 = tpu.matmul %0, %1, %cst {dimension_numbers = #tpu.dot_dimension_numbers<[1], [0], [0], [1], [0, 0, 1, 1], [], []>} : vector<8x32xf32>, vector<32x256xf32>, vector<8x256xf32> -> vector<8x256xf32>
    %c0_3 = arith.constant 0 : index
    %c0_4 = arith.constant 0 : index
    %3 = vector.load %arg3[%c0_3, %c0_4] : memref<1x256xf32, #tpu.memory_space<vmem>>, vector<1x256xf32>
    %4 = vector.broadcast %3 : vector<1x256xf32> to vector<8x256xf32>
    %5 = arith.addf %2, %4 : vector<8x256xf32>
    %cst_5 = arith.constant 0.000000e+00 : f32
    %6 = vector.broadcast %cst_5 : f32 to vector<8x256xf32>
    %7 = arith.maximumf %5, %6 : vector<8x256xf32>
    %c0_6 = arith.constant 0 : index
    %c0_7 = arith.constant 0 : index
    %8 = vector.load %arg4[%c0_6, %c0_7] : memref<256x128xf32, #tpu.memory_space<vmem>>, vector<256x128xf32>
    %cst_8 = arith.constant dense<0.000000e+00> : vector<8x128xf32>
    %9 = tpu.matmul %7, %8, %cst_8 {dimension_numbers = #tpu.dot_dimension_numbers<[1], [0], [0], [1], [0, 0, 1, 1], [], []>} : vector<8x256xf32>, vector<256x128xf32>, vector<8x128xf32> -> vector<8x128xf32>
    %c0_9 = arith.constant 0 : index
    %c0_10 = arith.constant 0 : index
    %10 = vector.load %arg5[%c0_9, %c0_10] : memref<1x128xf32, #tpu.memory_space<vmem>>, vector<1x128xf32>
    %11 = vector.broadcast %10 : vector<1x128xf32> to vector<8x128xf32>
    %12 = arith.addf %9, %11 : vector<8x128xf32>
    %c0_11 = arith.constant 0 : index
    %c0_12 = arith.constant 0 : index
    %13 = vector.load %arg6[%c0_11, %c0_12] : memref<8x128xf32, #tpu.memory_space<vmem>>, vector<8x128xf32>
    tpu.vector_store %arg6[%c0_11, %c0_12], %12 {strides = array<i32>} : memref<8x128xf32, #tpu.memory_space<vmem>>, vector<8x128xf32>,
    return
  }
  func.func @transform_0(%arg0: i32) -> (i32, i32) {
    %c0_i32 = arith.constant 0 : i32
    %c0_i32_0 = arith.constant 0 : i32
    return %arg0, %c0_i32 : i32, i32
  }
  func.func @transform_1(%arg0: i32) -> (i32, i32) {
    %c0_i32 = arith.constant 0 : i32
    %c0_i32_0 = arith.constant 0 : i32
    %c0_i32_1 = arith.constant 0 : i32
    return %c0_i32, %c0_i32_0 : i32, i32
  }
  func.func @transform_2(%arg0: i32) -> (i32, i32) {
    %c0_i32 = arith.constant 0 : i32
    %c0_i32_0 = arith.constant 0 : i32
    %c0_i32_1 = arith.constant 0 : i32
    return %c0_i32, %c0_i32_0 : i32, i32
  }
  func.func @transform_3(%arg0: i32) -> (i32, i32) {
    %c0_i32 = arith.constant 0 : i32
    %c0_i32_0 = arith.constant 0 : i32
    %c0_i32_1 = arith.constant 0 : i32
    return %c0_i32, %c0_i32_0 : i32, i32
  }
  func.func @transform_4(%arg0: i32) -> (i32, i32) {
    %c0_i32 = arith.constant 0 : i32
    %c0_i32_0 = arith.constant 0 : i32
    %c0_i32_1 = arith.constant 0 : i32
    return %c0_i32, %c0_i32_0 : i32, i32
  }
  func.func @transform_5(%arg0: i32) -> (i32, i32) {
    %c0_i32 = arith.constant 0 : i32
    %c0_i32_0 = arith.constant 0 : i32
    return %arg0, %c0_i32 : i32, i32
  }
}

</mosaic_0001>

<llo_original>
// kernel: my_sequential_list.1
$region0: #{my_sequential_list.1}
  #allocation0 [shape = 'u32[]', space=smem, size = 0x4, offset = 0x4, fixed_abs, tag = 'smem constant byte address 0x4 - core index']
  #allocation1 [shape = 'u32[72,128]{1,0:T(1,128)}', space=vmem, size = 0x9000, scoped, tag = 'internal scratch']
  %s0 = inlined_call_operand.vmem [shape: f32[8,32], index: 0, kind: input, shape index: {}]
  %s1 = inlined_call_operand.vmem [shape: f32[32,256], index: 1, kind: input, shape index: {}]
  %s2 = inlined_call_operand.vmem [shape: f32[1,256], index: 2, kind: input, shape index: {}]
  %s3 = inlined_call_operand.vmem [shape: f32[256,128], index: 3, kind: input, shape index: {}]
  %s4 = inlined_call_operand.vmem [shape: f32[1,128], index: 4, kind: input, shape index: {}]
  %s5 = inlined_call_operand.vmem [shape: f32[8,128], index: 5, kind: output, shape index: {}]
  %s6 = sld [smem:[#allocation0]]
  $region30: #{my_sequential_list.1} parent=0
    _
  %s8 = ssub.s32 1, %s6
  %s9 = scalar_select 0, %s8, %s6
  // Predicated region
  $region2: #{my_sequential_list.1} parent=0 // pred_check
    _
  $region3: #{my_sequential_list.1} parent=0 // pred_check_branch
    %11 = sbr.rel (0) target = $region5
  $region4: #{my_sequential_list.1} parent=0 // pred_region
    _
  $region5: #{my_sequential_list.1} parent=0 // pred_fallthru
    _
  // Predicated region
  $region6: #{my_sequential_list.1} parent=0 // pred_check
    _
  $region7: #{my_sequential_list.1} parent=0 // pred_check_branch
    %13 = sbr.rel (0) target = $region9
  $region8: #{my_sequential_list.1} parent=0 // pred_region
    _
  $region9: #{my_sequential_list.1} parent=0 // pred_fallthru
    _
  // Predicated region
  $region10: #{my_sequential_list.1} parent=0 // pred_check
    _
  $region11: #{my_sequential_list.1} parent=0 // pred_check_branch
    %15 = sbr.rel (0) target = $region13
  $region12: #{my_sequential_list.1} parent=0 // pred_region
    _
  $region13: #{my_sequential_list.1} parent=0 // pred_fallthru
    _
  // Predicated region
  $region14: #{my_sequential_list.1} parent=0 // pred_check
    _
  $region15: #{my_sequential_list.1} parent=0 // pred_check_branch
    %17 = sbr.rel (0) target = $region17
  $region16: #{my_sequential_list.1} parent=0 // pred_region
    _
  $region17: #{my_sequential_list.1} parent=0 // pred_fallthru
    _
  // Predicated region
  $region18: #{my_sequential_list.1} parent=0 // pred_check
    _
  $region19: #{my_sequential_list.1} parent=0 // pred_check_branch
    %19 = sbr.rel (0) target = $region21
  $region20: #{my_sequential_list.1} parent=0 // pred_region
    _
  $region21: #{my_sequential_list.1} parent=0 // pred_fallthru
    _
  %v20 = vld [vmem:[%s0] sm:$0xff]
  %v21 = vld [vmem:[%s1] sm:$0xff]
  %v22 = vld [vmem:[%s1 + $0x8] sm:$0xff]
  %v23 = vld [vmem:[%s1 + $0x10] sm:$0xff]
  %v24 = vld [vmem:[%s1 + $0x18] sm:$0xff]
  %v25 = vld [vmem:[%s1 + $0x20] sm:$0xff]
  %v26 = vld [vmem:[%s1 + $0x28] sm:$0xff]
  %v27 = vld [vmem:[%s1 + $0x30] sm:$0xff]
  %v28 = vld [vmem:[%s1 + $0x38] sm:$0xff]
  %v29 = vld [vmem:[%s2] sm:$0x3]
  %v31 = vperm.slane %v29, 0
  %v32 = vperm.slane %v29, 1
  %vm35 = vcmask 261120
  %v37 = vsel %vm35, %v20, 0
  %39 = vmatpush.msra.mxu0 0.0
  %40 = vmatpush.msra.mxu0 0.0
  %41 = vmatpush.msra.mxu0 0.0
  %42 = vmatpush.msra.mxu0 0.0
  %43 = vmatpush.msra.mxu0 0.0
  %44 = vmatpush.msra.mxu0 0.0
  %45 = vmatpush.msra.mxu0 0.0
  %46 = vmatpush.msra.mxu0 0.0
  %47 = vmatpush.msra.mxu0 0.0
  %48 = vmatpush.msra.mxu0 0.0
  %49 = vmatpush.msra.mxu0 0.0
  %50 = vmatpush.msra.mxu0 0.0
  %51 = vmatpush.msra.mxu0 %v27
  %52 = vmatpush.msra.mxu0 %v25
  %53 = vmatpush.msra.mxu0 %v23
  %54 = vmatpush.msra.mxu0 %v21
  %55 = vmatmul.f32.gmra.mxu0 %v37
  %v56 = vpop.f32.mrf.mxu0
  %v57 = vadd.f32 %v31, %v56
  %58 = vdwg.mxu0
  %59 = vmatpush.msra.mxu0 0.0
  %60 = vmatpush.msra.mxu0 0.0
  %61 = vmatpush.msra.mxu0 0.0
  %62 = vmatpush.msra.mxu0 0.0
  %63 = vmatpush.msra.mxu0 0.0
  %64 = vmatpush.msra.mxu0 0.0
  %65 = vmatpush.msra.mxu0 0.0
  %66 = vmatpush.msra.mxu0 0.0
  %67 = vmatpush.msra.mxu0 0.0
  %68 = vmatpush.msra.mxu0 0.0
  %69 = vmatpush.msra.mxu0 0.0
  %70 = vmatpush.msra.mxu0 0.0
  %71 = vmatpush.msra.mxu0 %v28
  %72 = vmatpush.msra.mxu0 %v26
  %73 = vmatpush.msra.mxu0 %v24
  %74 = vmatpush.msra.mxu0 %v22
  %75 = vmatmul.f32.gmra.mxu0 %v37
  %v76 = vpop.f32.mrf.mxu0
  %v77 = vadd.f32 %v32, %v76
  %78 = vdwg.mxu0
  %v79 = vmax.f32 %v57, 0.0
  %v80 = vmax.f32 %v77, 0.0
  %v81 = vld [vmem:[%s3] sm:$0xff]
  %v82 = vld [vmem:[%s3 + $0x8] sm:$0xff]
  %v83 = vld [vmem:[%s3 + $0x10] sm:$0xff]
  %v84 = vld [vmem:[%s3 + $0x18] sm:$0xff]
  %v85 = vld [vmem:[%s3 + $0x20] sm:$0xff]
  %v86 = vld [vmem:[%s3 + $0x28] sm:$0xff]
  %v87 = vld [vmem:[%s3 + $0x30] sm:$0xff]
  %v88 = vld [vmem:[%s3 + $0x38] sm:$0xff]
  %v89 = vld [vmem:[%s3 + $0x40] sm:$0xff]
  %v90 = vld [vmem:[%s3 + $0x48] sm:$0xff]
  %v91 = vld [vmem:[%s3 + $0x50] sm:$0xff]
  %v92 = vld [vmem:[%s3 + $0x58] sm:$0xff]
  %v93 = vld [vmem:[%s3 + $0x60] sm:$0xff]
  %v94 = vld [vmem:[%s3 + $0x68] sm:$0xff]
  %v95 = vld [vmem:[%s3 + $0x70] sm:$0xff]
  %v96 = vld [vmem:[%s3 + $0x78] sm:$0xff]
  %v97 = vld [vmem:[%s3 + $0x80] sm:$0xff]
  %v98 = vld [vmem:[%s3 + $0x88] sm:$0xff]
  %v99 = vld [vmem:[%s3 + $0x90] sm:$0xff]
  %v100 = vld [vmem:[%s3 + $0x98] sm:$0xff]
  %v101 = vld [vmem:[%s3 + $0xa0] sm:$0xff]
  %v102 = vld [vmem:[%s3 + $0xa8] sm:$0xff]
  %v103 = vld [vmem:[%s3 + $0xb0] sm:$0xff]
  %v104 = vld [vmem:[%s3 + $0xb8] sm:$0xff]
  %v105 = vld [vmem:[%s3 + $0xc0] sm:$0xff]
  %v106 = vld [vmem:[%s3 + $0xc8] sm:$0xff]
  %v107 = vld [vmem:[%s3 + $0xd0] sm:$0xff]
  %v108 = vld [vmem:[%s3 + $0xd8] sm:$0xff]
  %v109 = vld [vmem:[%s3 + $0xe0] sm:$0xff]
  %v110 = vld [vmem:[%s3 + $0xe8] sm:$0xff]
  %v111 = vld [vmem:[%s3 + $0xf0] sm:$0xff]
  %v112 = vld [vmem:[%s3 + $0xf8] sm:$0xff]
  %v113 = vld [vmem:[%s4] sm:$0x1]
  %v115 = vperm.slane %v113, 0
  %117 = vmatpush.msra.mxu0 %v96
  %118 = vmatpush.msra.mxu0 %v95
  %119 = vmatpush.msra.mxu0 %v94
  %120 = vmatpush.msra.mxu0 %v93
  %121 = vmatpush.msra.mxu0 %v92
  %122 = vmatpush.msra.mxu0 %v91
  %123 = vmatpush.msra.mxu0 %v90
  %124 = vmatpush.msra.mxu0 %v89
  %125 = vmatpush.msra.mxu0 %v88
  %126 = vmatpush.msra.mxu0 %v87
  %127 = vmatpush.msra.mxu0 %v86
  %128 = vmatpush.msra.mxu0 %v85
  %129 = vmatpush.msra.mxu0 %v84
  %130 = vmatpush.msra.mxu0 %v83
  %131 = vmatpush.msra.mxu0 %v82
  %132 = vmatpush.msra.mxu0 %v81
  %133 = vmatmul.f32.gmra.mxu0 %v79
  %v134 = vpop.f32.mrf.mxu0
  %v135 = vadd.f32 %v115, %v134
  %136 = vdwg.mxu0
  %137 = vmatpush.msra.mxu0 %v112
  %138 = vmatpush.msra.mxu0 %v111
  %139 = vmatpush.msra.mxu0 %v110
  %140 = vmatpush.msra.mxu0 %v109
  %141 = vmatpush.msra.mxu0 %v108
  %142 = vmatpush.msra.mxu0 %v107
  %143 = vmatpush.msra.mxu0 %v106
  %144 = vmatpush.msra.mxu0 %v105
  %145 = vmatpush.msra.mxu0 %v104
  %146 = vmatpush.msra.mxu0 %v103
  %147 = vmatpush.msra.mxu0 %v102
  %148 = vmatpush.msra.mxu0 %v101
  %149 = vmatpush.msra.mxu0 %v100
  %150 = vmatpush.msra.mxu0 %v99
  %151 = vmatpush.msra.mxu0 %v98
  %152 = vmatpush.msra.mxu0 %v97
  %153 = vmatmul.f32.gmra.mxu0 %v80
  %v154 = vpop.f32.mrf.mxu0
  %v155 = vadd.f32 %v135, %v154
  %156 = vdwg.mxu0
  %157 = vst [vmem:[%s5] sm:$0xff] %v155
  // Predicated region
  $region22: #{my_sequential_list.1} parent=0 // pred_check
    _
  $region23: #{my_sequential_list.1} parent=0 // pred_check_branch
    %159 = sbr.rel (0) target = $region25
  $region24: #{my_sequential_list.1} parent=0 // pred_region
    _
  $region25: #{my_sequential_list.1} parent=0 // pred_fallthru
    _
  // Predicated region
  $region26: #{my_sequential_list.1} parent=0 // pred_check
    _
  $region27: #{my_sequential_list.1} parent=0 // pred_check_branch
    %161 = sbr.rel (0) target = $region29
  $region28: #{my_sequential_list.1} parent=0 // pred_region
    _
  $region29: #{my_sequential_list.1} parent=0 // pred_fallthru
    _

</llo_original>
